<compile_context>
chip_gen: v6e
topology: v6e:2x2x1
jax: 0.10.0
libtpu: 0.0.40
codegen_flags: <defaults>
</compile_context>

<pallas_src>
import functools

import jax
import jax.numpy as jnp
from jax.experimental import pallas as pl
from jax.experimental.pallas import tpu as pltpu

HIDDEN = 128


def generator_kernel(z_ref, w1t_ref, b1_ref, w2t_ref, b2_ref, o_ref,
                     *, compute_dtype):
    # z_ref:  [TB, F] (original dtype)   w1t_ref: [F, H]  (pre-transposed)
    # b1_ref: [1, H] f32                 w2t_ref: [H, F]  (pre-transposed)
    # b2_ref: [1, F] f32                 o_ref:   [TB, F]
    z = z_ref[...]
    if compute_dtype is not None:
        # In-kernel VPU cast: hidden under DMA, no extra HBM pass over z.
        z = z.astype(compute_dtype)
    # h = z @ W1^T : NN contraction on wrapper-pre-transposed weights, so the
    # loop body contains no per-step weight transpose. f32 MXU accumulation.
    h = jnp.dot(z, w1t_ref[...], preferred_element_type=jnp.float32)
    h = jnp.maximum(h + b1_ref[...], 0.0)                # bias + relu in f32
    y = jnp.dot(h.astype(w2t_ref.dtype), w2t_ref[...],
                preferred_element_type=jnp.float32)
    y = y + b2_ref[...]
    o_ref[...] = y.astype(o_ref.dtype)


def generator_forward(z, w1, b1, w2, b2, *, block_b=None, compute_dtype=None,
                      out_dtype=None, vmem_budget_bytes=16 * 1024 * 1024):
    """Forward pass of Generator.

    z:  [B, F]   w1: [H, F] (torch nn.Linear layout)   b1: [H]
    w2: [F, H]   b2: [F]
    compute_dtype: optional MXU operand dtype (e.g. jnp.bfloat16 on v6e/v7x).
                   z is cast INSIDE the kernel; weights (tiny) in the wrapper.
                   Accumulation, bias add and relu stay in f32.
    """
    B, F = z.shape
    H = w1.shape[0]
    if out_dtype is None:
        out_dtype = z.dtype

    # One-time wrapper-side transpose of the tiny weights to [in, out] layout.
    w1t = w1.T                                    # [F, H]
    w2t = w2.T                                    # [H, F]
    if compute_dtype is not None:
        w1t = w1t.astype(compute_dtype)
        w2t = w2t.astype(compute_dtype)

    # Biases as [1, out] rows (lane-dense broadcast over batch), kept in f32.
    b1_r = b1.reshape(1, H).astype(jnp.float32)
    b2_r = b2.reshape(1, F).astype(jnp.float32)

    # Sublane-packing multiple of the streamed z dtype (8 f32, 16 bf16, 32 i8).
    z_item = jnp.dtype(z.dtype).itemsize
    out_item = jnp.dtype(out_dtype).itemsize
    sub = {4: 8, 2: 16, 1: 32}.get(z_item, 8)

    # Batch tile: size against VMEM budget for double-buffered z-in + out
    # tiles (weights/biases are VMEM-resident and tiny). Keep headroom for
    # v7x's 64 MiB VMEM / 32 MiB scoped default; cap at 8192 rows.
    if block_b is None:
        per_row = 2 * F * (z_item + out_item)     # dbl-buffered bytes per row
        block_b = min(8192, max(sub, vmem_budget_bytes // max(per_row, 1)))
    tb = min(block_b, B)
    # Guarantee >= 2 grid steps when B allows it, so the "parallel" batch axis
    # can be sharded across v7x's 2 TensorCores (harmless on v5e/v6e).
    if B >= 2 * sub and tb > pl.cdiv(B, 2):
        tb = pl.cdiv(B, 2)
    if tb != B:
        tb = max(sub, (tb // sub) * sub)
    grid = (pl.cdiv(B, tb),)

    flops = 2 * B * (F * H + H * F)
    bytes_accessed = (
        B * F * z_item                             # z streamed at original size
        + w1t.size * jnp.dtype(w1t.dtype).itemsize
        + w2t.size * jnp.dtype(w2t.dtype).itemsize
        + b1_r.size * 4 + b2_r.size * 4
        + B * F * out_item                         # output writeback
    )

    kernel = functools.partial(generator_kernel, compute_dtype=compute_dtype)

    return pl.pallas_call(
        kernel,
        out_shape=jax.ShapeDtypeStruct((B, F), out_dtype),
        grid=grid,
        in_specs=[
            pl.BlockSpec((tb, F), lambda i: (i, 0)),   # z: batch-tiled stream
            pl.BlockSpec((F, H), lambda i: (0, 0)),    # w1^T: VMEM-resident
            pl.BlockSpec((1, H), lambda i: (0, 0)),    # b1
            pl.BlockSpec((H, F), lambda i: (0, 0)),    # w2^T: VMEM-resident
            pl.BlockSpec((1, F), lambda i: (0, 0)),    # b2
        ],
        out_specs=pl.BlockSpec((tb, F), lambda i: (i, 0)),
        compiler_params=pltpu.CompilerParams(
            dimension_semantics=("parallel",),         # shard batch across TCs
        ),
        cost_estimate=pl.CostEstimate(
            flops=flops, transcendentals=0, bytes_accessed=bytes_accessed),
    )(z, w1t, b1_r, w2t, b2_r)


def reference_forward(z, w1, b1, w2, b2):
    h = jnp.maximum(z @ w1.T + b1, 0.0)
    return h @ w2.T + b2


if __name__ == "__main__":
    key = jax.random.PRNGKey(0)
    F = 32  # num_features

    k_z, k_w1, k_b1, k_w2, k_b2, k_z2 = jax.random.split(key, 6)

    # Deterministic parameter init (torch nn.Linear layout: weight [out, in]).
    bound1 = 1.0 / (F ** 0.5)
    w1 = jax.random.uniform(k_w1, (HIDDEN, F), jnp.float32, -bound1, bound1)
    b1 = jax.random.uniform(k_b1, (HIDDEN,), jnp.float32, -bound1, bound1)
    bound2 = 1.0 / (HIDDEN ** 0.5)
    w2 = jax.random.uniform(k_w2, (F, HIDDEN), jnp.float32, -bound2, bound2)
    b2 = jax.random.uniform(k_b2, (F,), jnp.float32, -bound2, bound2)

    # --- small batch (single grid step, block == full array) ---
    B = 8
    z = jax.random.normal(k_z, (B, F), dtype=jnp.float32)
    ref = reference_forward(z, w1, b1, w2, b2)

    out = generator_forward(z, w1, b1, w2, b2)
    jax.block_until_ready(out)
    assert out.shape == (B, F)
    assert jnp.allclose(out, ref, atol=1e-5, rtol=1e-5)

    # bf16 compute path (cast inside the kernel; f32 accumulation).
    out_bf16 = generator_forward(z, w1, b1, w2, b2, compute_dtype=jnp.bfloat16)
    jax.block_until_ready(out_bf16)
    assert out_bf16.shape == (B, F)
    assert jnp.allclose(out_bf16, ref, atol=5e-2, rtol=5e-2)

    # --- larger batch: exercises >=2 grid steps and a ragged last tile ---
    B2 = 40
    z2 = jax.random.normal(k_z2, (B2, F), dtype=jnp.float32)
    ref2 = reference_forward(z2, w1, b1, w2, b2)
    out2 = generator_forward(z2, w1, b1, w2, b2)
    jax.block_until_ready(out2)
    assert out2.shape == (B2, F)
    assert jnp.allclose(out2, ref2, atol=1e-5, rtol=1e-5)

    print("KERNEL_OK")
</pallas_src>

<mosaic_0001>
module attributes {stable_mosaic.version = 11 : i64} {
  func.func @generator_kernel(%arg0: i32, %arg1: memref<8x32xf32, #tpu.memory_space<vmem>>, %arg2: memref<32x128xf32, #tpu.memory_space<vmem>>, %arg3: memref<1x128xf32, #tpu.memory_space<vmem>>, %arg4: memref<128x32xf32, #tpu.memory_space<vmem>>, %arg5: memref<1x32xf32, #tpu.memory_space<vmem>>, %arg6: memref<8x32xf32, #tpu.memory_space<vmem>>) attributes {dimension_semantics = [#tpu.dimension_semantics<parallel>], iteration_bounds = array<i64: 1>, scalar_prefetch = 0 : i64, scratch_operands = 0 : i64, tpu.core_type = #tpu.core_type<tc>, window_params = [{transform_indices = @transform_0, window_bounds = array<i64: 8, 32>}, {pipeline_mode = #tpu.pipeline_mode<synchronous>, transform_indices = @transform_1, window_bounds = array<i64: 32, 128>}, {pipeline_mode = #tpu.pipeline_mode<synchronous>, transform_indices = @transform_2, window_bounds = array<i64: 1, 128>}, {pipeline_mode = #tpu.pipeline_mode<synchronous>, transform_indices = @transform_3, window_bounds = array<i64: 128, 32>}, {pipeline_mode = #tpu.pipeline_mode<synchronous>, transform_indices = @transform_4, window_bounds = array<i64: 1, 32>}, {transform_indices = @transform_5, window_bounds = array<i64: 8, 32>}]} {
    %c0 = arith.constant 0 : index
    %c0_0 = arith.constant 0 : index
    %0 = vector.load %arg1[%c0, %c0_0] : memref<8x32xf32, #tpu.memory_space<vmem>>, vector<8x32xf32>
    %c0_1 = arith.constant 0 : index
    %c0_2 = arith.constant 0 : index
    %1 = vector.load %arg2[%c0_1, %c0_2] : memref<32x128xf32, #tpu.memory_space<vmem>>, vector<32x128xf32>
    %cst = arith.constant dense<0.000000e+00> : vector<8x128xf32>
    %2 = tpu.matmul %0, %1, %cst {dimension_numbers = #tpu.dot_dimension_numbers<[1], [0], [0], [1], [0, 0, 1, 1], [], []>} : vector<8x32xf32>, vector<32x128xf32>, vector<8x128xf32> -> vector<8x128xf32>
    %c0_3 = arith.constant 0 : index
    %c0_4 = arith.constant 0 : index
    %3 = vector.load %arg3[%c0_3, %c0_4] : memref<1x128xf32, #tpu.memory_space<vmem>>, vector<1x128xf32>
    %4 = vector.broadcast %3 : vector<1x128xf32> to vector<8x128xf32>
    %5 = arith.addf %2, %4 : vector<8x128xf32>
    %cst_5 = arith.constant 0.000000e+00 : f32
    %6 = vector.broadcast %cst_5 : f32 to vector<8x128xf32>
    %7 = arith.maximumf %5, %6 : vector<8x128xf32>
    %c0_6 = arith.constant 0 : index
    %c0_7 = arith.constant 0 : index
    %8 = vector.load %arg4[%c0_6, %c0_7] : memref<128x32xf32, #tpu.memory_space<vmem>>, vector<128x32xf32>
    %cst_8 = arith.constant dense<0.000000e+00> : vector<8x32xf32>
    %9 = tpu.matmul %7, %8, %cst_8 {dimension_numbers = #tpu.dot_dimension_numbers<[1], [0], [0], [1], [0, 0, 1, 1], [], []>} : vector<8x128xf32>, vector<128x32xf32>, vector<8x32xf32> -> vector<8x32xf32>
    %c0_9 = arith.constant 0 : index
    %c0_10 = arith.constant 0 : index
    %10 = vector.load %arg5[%c0_9, %c0_10] : memref<1x32xf32, #tpu.memory_space<vmem>>, vector<1x32xf32>
    %11 = vector.broadcast %10 : vector<1x32xf32> to vector<8x32xf32>
    %12 = arith.addf %9, %11 : vector<8x32xf32>
    %c0_11 = arith.constant 0 : index
    %c0_12 = arith.constant 0 : index
    %13 = vector.load %arg6[%c0_11, %c0_12] : memref<8x32xf32, #tpu.memory_space<vmem>>, vector<8x32xf32>
    tpu.vector_store %arg6[%c0_11, %c0_12], %12 {strides = array<i32>} : memref<8x32xf32, #tpu.memory_space<vmem>>, vector<8x32xf32>,
    return
  }
  func.func @transform_0(%arg0: i32) -> (i32, i32) {
    %c0_i32 = arith.constant 0 : i32
    %c0_i32_0 = arith.constant 0 : i32
    return %arg0, %c0_i32 : i32, i32
  }
  func.func @transform_1(%arg0: i32) -> (i32, i32) {
    %c0_i32 = arith.constant 0 : i32
    %c0_i32_0 = arith.constant 0 : i32
    %c0_i32_1 = arith.constant 0 : i32
    return %c0_i32, %c0_i32_0 : i32, i32
  }
  func.func @transform_2(%arg0: i32) -> (i32, i32) {
    %c0_i32 = arith.constant 0 : i32
    %c0_i32_0 = arith.constant 0 : i32
    %c0_i32_1 = arith.constant 0 : i32
    return %c0_i32, %c0_i32_0 : i32, i32
  }
  func.func @transform_3(%arg0: i32) -> (i32, i32) {
    %c0_i32 = arith.constant 0 : i32
    %c0_i32_0 = arith.constant 0 : i32
    %c0_i32_1 = arith.constant 0 : i32
    return %c0_i32, %c0_i32_0 : i32, i32
  }
  func.func @transform_4(%arg0: i32) -> (i32, i32) {
    %c0_i32 = arith.constant 0 : i32
    %c0_i32_0 = arith.constant 0 : i32
    %c0_i32_1 = arith.constant 0 : i32
    return %c0_i32, %c0_i32_0 : i32, i32
  }
  func.func @transform_5(%arg0: i32) -> (i32, i32) {
    %c0_i32 = arith.constant 0 : i32
    %c0_i32_0 = arith.constant 0 : i32
    return %arg0, %c0_i32 : i32, i32
  }
}

</mosaic_0001>

<llo_original>
// kernel: tpu_custom_call.1
$region0: #{tpu_custom_call.1}
  #allocation0 [shape = 'u32[]', space=smem, size = 0x4, offset = 0x4, fixed_abs, tag = 'smem constant byte address 0x4 - core index']
  #allocation1 [shape = 'u32[144,128]{1,0:T(1,128)}', space=vmem, size = 0x12000, scoped, tag = 'internal scratch']
  %s0 = inlined_call_operand.vmem [shape: f32[8,32], index: 0, kind: input, shape index: {}]
  %s1 = inlined_call_operand.vmem [shape: f32[32,128], index: 1, kind: input, shape index: {}]
  %s2 = inlined_call_operand.vmem [shape: f32[1,128], index: 2, kind: input, shape index: {}]
  %s3 = inlined_call_operand.vmem [shape: f32[128,32], index: 3, kind: input, shape index: {}]
  %s4 = inlined_call_operand.vmem [shape: f32[1,32], index: 4, kind: input, shape index: {}]
  %s5 = inlined_call_operand.hbm [shape: f32[8,32], index: 5, kind: output, shape index: {}]
  %s6 = sld [smem:[#allocation0]]
  $region30: #{tpu_custom_call.1} parent=0
    _
  %s8 = ssub.s32 1, %s6
  %s9 = scalar_select 0, %s8, %s6
  $region1: #{tpu_custom_call.1} parent=0
    #allocation2 [shape = 'u8[4096]{0}', space=vmem, size = 0x1000, scoped, tag = 'output window, operand 0, single buffered']
    #allocation3 [shape = 's32[1]{0}', space=sflag, size = 0x4, scoped, tag = 'scoped memory for tpu_custom_call.1']
    %10 = vsyncpa [#allocation3], 0
    // Predicated region
    $region2: #{tpu_custom_call.1} parent=1 // pred_check
      _
    $region3: #{tpu_custom_call.1} parent=1 // pred_check_branch
      %12 = sbr.rel (0) target = $region5
    $region4: #{tpu_custom_call.1} parent=1 // pred_region
      _
    $region5: #{tpu_custom_call.1} parent=1 // pred_fallthru
      _
    // Predicated region
    $region6: #{tpu_custom_call.1} parent=1 // pred_check
      _
    $region7: #{tpu_custom_call.1} parent=1 // pred_check_branch
      %14 = sbr.rel (0) target = $region9
    $region8: #{tpu_custom_call.1} parent=1 // pred_region
      _
    $region9: #{tpu_custom_call.1} parent=1 // pred_fallthru
      _
    // Predicated region
    $region10: #{tpu_custom_call.1} parent=1 // pred_check
      _
    $region11: #{tpu_custom_call.1} parent=1 // pred_check_branch
      %16 = sbr.rel (0) target = $region13
    $region12: #{tpu_custom_call.1} parent=1 // pred_region
      _
    $region13: #{tpu_custom_call.1} parent=1 // pred_fallthru
      _
    // Predicated region
    $region14: #{tpu_custom_call.1} parent=1 // pred_check
      _
    $region15: #{tpu_custom_call.1} parent=1 // pred_check_branch
      %18 = sbr.rel (0) target = $region17
    $region16: #{tpu_custom_call.1} parent=1 // pred_region
      _
    $region17: #{tpu_custom_call.1} parent=1 // pred_fallthru
      _
    // Predicated region
    $region18: #{tpu_custom_call.1} parent=1 // pred_check
      _
    $region19: #{tpu_custom_call.1} parent=1 // pred_check_branch
      %20 = sbr.rel (0) target = $region21
    $region20: #{tpu_custom_call.1} parent=1 // pred_region
      _
    $region21: #{tpu_custom_call.1} parent=1 // pred_fallthru
      _
    %v21 = vld [vmem:[%s0] sm:$0xff]
    %v22 = vld [vmem:[%s1] sm:$0xff]
    %v23 = vld [vmem:[%s1 + $0x8] sm:$0xff]
    %v24 = vld [vmem:[%s1 + $0x10] sm:$0xff]
    %v25 = vld [vmem:[%s1 + $0x18] sm:$0xff]
    %v26 = vld [vmem:[%s2] sm:$0x1]
    %v28 = vlaneseq
    %v29 = vshrl.u32 %v28, 7
    %v30 = vsub.s32 0, %v29
    %v31 = vrot.slane %v26, %v30
    %vm33 = vcmask 261120
    %v35 = vsel %vm33, %v21, 0
    %37 = vmatprep.subr.mxu0 0.0
    %38 = vmatpush1.msra.mxu0 0.0
    %39 = vmatprep.subr.mxu0 0.0
    %40 = vmatpush1.msra.mxu0 0.0
    %41 = vmatprep.subr.mxu0 0.0
    %42 = vmatpush1.msra.mxu0 0.0
    %43 = vmatprep.subr.mxu0 0.0
    %44 = vmatpush1.msra.mxu0 0.0
    %45 = vmatprep.subr.mxu0 0.0
    %46 = vmatpush1.msra.mxu0 0.0
    %47 = vmatprep.subr.mxu0 0.0
    %48 = vmatpush1.msra.mxu0 0.0
    %49 = vmatprep.subr.mxu0 0.0
    %50 = vmatpush1.msra.mxu0 0.0
    %51 = vmatprep.subr.mxu0 0.0
    %52 = vmatpush1.msra.mxu0 0.0
    %53 = vmatprep.subr.mxu0 0.0
    %54 = vmatpush1.msra.mxu0 0.0
    %55 = vmatprep.subr.mxu0 0.0
    %56 = vmatpush1.msra.mxu0 0.0
    %57 = vmatprep.subr.mxu0 0.0
    %58 = vmatpush1.msra.mxu0 0.0
    %59 = vmatprep.subr.mxu0 0.0
    %60 = vmatpush1.msra.mxu0 0.0
    %61 = vmatprep.subr.mxu0 0.0
    %62 = vmatpush1.msra.mxu0 %v25
    %63 = vmatprep.subr.mxu0 0.0
    %64 = vmatpush1.msra.mxu0 %v24
    %65 = vmatprep.subr.mxu0 0.0
    %66 = vmatpush1.msra.mxu0 %v23
    %67 = vmatprep.subr.mxu0 0.0
    %68 = vmatpush1.msra.mxu0 %v22
    %69 = vmatprep.subr.mxu0 0.0
    %70 = vmatpush2.msra.mxu0 0.0
    %71 = vmatprep.subr.mxu0 0.0
    %72 = vmatpush2.msra.mxu0 0.0
    %73 = vmatprep.subr.mxu0 0.0
    %74 = vmatpush2.msra.mxu0 0.0
    %75 = vmatprep.subr.mxu0 0.0
    %76 = vmatpush2.msra.mxu0 0.0
    %77 = vmatprep.subr.mxu0 0.0
    %78 = vmatpush2.msra.mxu0 0.0
    %79 = vmatprep.subr.mxu0 0.0
    %80 = vmatpush2.msra.mxu0 0.0
    %81 = vmatprep.subr.mxu0 0.0
    %82 = vmatpush2.msra.mxu0 0.0
    %83 = vmatprep.subr.mxu0 0.0
    %84 = vmatpush2.msra.mxu0 0.0
    %85 = vmatprep.subr.mxu0 0.0
    %86 = vmatpush2.msra.mxu0 0.0
    %87 = vmatprep.subr.mxu0 0.0
    %88 = vmatpush2.msra.mxu0 0.0
    %89 = vmatprep.subr.mxu0 0.0
    %90 = vmatpush2.msra.mxu0 0.0
    %91 = vmatprep.subr.mxu0 0.0
    %92 = vmatpush2.msra.mxu0 0.0
    %93 = vmatprep.subr.mxu0 0.0
    %94 = vmatpush2.msra.mxu0 0.0
    %95 = vmatprep.subr.mxu0 0.0
    %96 = vmatpush2.msra.mxu0 0.0
    %97 = vmatprep.subr.mxu0 0.0
    %98 = vmatpush2.msra.mxu0 0.0
    %99 = vmatprep.subr.mxu0 0.0
    %100 = vmatpush2.msra.mxu0 0.0
    %101 = vmatprep.mubr.f32.mxu0 0.0
    %102 = vmatmul.mubr.f32.gmra.mxu0 %v35
    %v103 = vpop.f32.mrf.mxu0
    %v104 = vadd.f32 %v31, %v103
    %v105 = vpop.f32.mrf.mxu0
    %106 = vdwg.mxu0
    %v107 = vmax.f32 %v104, 0.0
    %v108 = vld [vmem:[%s3] sm:$0xff]
    %v109 = vld [vmem:[%s3 + $0x8] sm:$0xff]
    %v110 = vld [vmem:[%s3 + $0x10] sm:$0xff]
    %v111 = vld [vmem:[%s3 + $0x18] sm:$0xff]
    %v112 = vld [vmem:[%s3 + $0x20] sm:$0xff]
    %v113 = vld [vmem:[%s3 + $0x28] sm:$0xff]
    %v114 = vld [vmem:[%s3 + $0x30] sm:$0xff]
    %v115 = vld [vmem:[%s3 + $0x38] sm:$0xff]
    %v116 = vld [vmem:[%s3 + $0x40] sm:$0xff]
    %v117 = vld [vmem:[%s3 + $0x48] sm:$0xff]
    %v118 = vld [vmem:[%s3 + $0x50] sm:$0xff]
    %v119 = vld [vmem:[%s3 + $0x58] sm:$0xff]
    %v120 = vld [vmem:[%s3 + $0x60] sm:$0xff]
    %v121 = vld [vmem:[%s3 + $0x68] sm:$0xff]
    %v122 = vld [vmem:[%s3 + $0x70] sm:$0xff]
    %v123 = vld [vmem:[%s3 + $0x78] sm:$0xff]
    %v124 = vld [vmem:[%s4] sm:$0x1]
    %v126 = vlaneseq
    %v127 = vshrl.u32 %v126, 7
    %v128 = vsub.s32 0, %v127
    %v129 = vrot.slane %v124, %v128
    %131 = vmatprep.subr.mxu0 0.0
    %132 = vmatpush1.msra.mxu0 %v123
    %133 = vmatprep.subr.mxu0 0.0
    %134 = vmatpush1.msra.mxu0 %v122
    %135 = vmatprep.subr.mxu0 0.0
    %136 = vmatpush1.msra.mxu0 %v121
    %137 = vmatprep.subr.mxu0 0.0
    %138 = vmatpush1.msra.mxu0 %v120
    %139 = vmatprep.subr.mxu0 0.0
    %140 = vmatpush1.msra.mxu0 %v119
    %141 = vmatprep.subr.mxu0 0.0
    %142 = vmatpush1.msra.mxu0 %v118
    %143 = vmatprep.subr.mxu0 0.0
    %144 = vmatpush1.msra.mxu0 %v117
    %145 = vmatprep.subr.mxu0 0.0
    %146 = vmatpush1.msra.mxu0 %v116
    %147 = vmatprep.subr.mxu0 0.0
    %148 = vmatpush1.msra.mxu0 %v115
    %149 = vmatprep.subr.mxu0 0.0
    %150 = vmatpush1.msra.mxu0 %v114
    %151 = vmatprep.subr.mxu0 0.0
    %152 = vmatpush1.msra.mxu0 %v113
    %153 = vmatprep.subr.mxu0 0.0
    %154 = vmatpush1.msra.mxu0 %v112
    %155 = vmatprep.subr.mxu0 0.0
    %156 = vmatpush1.msra.mxu0 %v111
    %157 = vmatprep.subr.mxu0 0.0
    %158 = vmatpush1.msra.mxu0 %v110
    %159 = vmatprep.subr.mxu0 0.0
    %160 = vmatpush1.msra.mxu0 %v109
    %161 = vmatprep.subr.mxu0 0.0
    %162 = vmatpush1.msra.mxu0 %v108
    %163 = vmatprep.subr.mxu0 0.0
    %164 = vmatpush2.msra.mxu0 0.0
    %165 = vmatprep.subr.mxu0 0.0
    %166 = vmatpush2.msra.mxu0 0.0
    %167 = vmatprep.subr.mxu0 0.0
    %168 = vmatpush2.msra.mxu0 0.0
    %169 = vmatprep.subr.mxu0 0.0
    %170 = vmatpush2.msra.mxu0 0.0
    %171 = vmatprep.subr.mxu0 0.0
    %172 = vmatpush2.msra.mxu0 0.0
    %173 = vmatprep.subr.mxu0 0.0
    %174 = vmatpush2.msra.mxu0 0.0
    %175 = vmatprep.subr.mxu0 0.0
    %176 = vmatpush2.msra.mxu0 0.0
    %177 = vmatprep.subr.mxu0 0.0
    %178 = vmatpush2.msra.mxu0 0.0
    %179 = vmatprep.subr.mxu0 0.0
    %180 = vmatpush2.msra.mxu0 0.0
    %181 = vmatprep.subr.mxu0 0.0
    %182 = vmatpush2.msra.mxu0 0.0
    %183 = vmatprep.subr.mxu0 0.0
    %184 = vmatpush2.msra.mxu0 0.0
    %185 = vmatprep.subr.mxu0 0.0
    %186 = vmatpush2.msra.mxu0 0.0
    %187 = vmatprep.subr.mxu0 0.0
    %188 = vmatpush2.msra.mxu0 0.0
    %189 = vmatprep.subr.mxu0 0.0
    %190 = vmatpush2.msra.mxu0 0.0
    %191 = vmatprep.subr.mxu0 0.0
    %192 = vmatpush2.msra.mxu0 0.0
    %193 = vmatprep.subr.mxu0 0.0
    %194 = vmatpush2.msra.mxu0 0.0
    %195 = vmatprep.mubr.f32.mxu0 0.0
    %196 = vmatmul.mubr.f32.gmra.mxu0 %v107
    %v197 = vpop.f32.mrf.mxu0
    %v198 = vadd.f32 %v129, %v197
    %v199 = vpop.f32.mrf.mxu0
    %200 = vdwg.mxu0
    %201 = vst.msk [vmem:[#allocation2] sm:$0xff] %vm33, %v198
    // Predicated region
    $region22: #{tpu_custom_call.1} parent=1 // pred_check
      _
    $region23: #{tpu_custom_call.1} parent=1 // pred_check_branch
      %203 = sbr.rel (0) target = $region25
    $region24: #{tpu_custom_call.1} parent=1 // pred_region
      %s205 = ssub.s32 128, 128
      %206 = vsyncadd [#allocation3], %s205
      %s208 = sshll.u32 [#allocation2], 4
      %s209 = int_to_ptr.vmem [resolvable:$true] %s208
      %211 = dma.vmem_to_hbm [thread:$0]  %s209, 128, %s5, [#allocation3]
    $region25: #{tpu_custom_call.1} parent=1 // pred_fallthru
      _
    // Predicated region
    $region26: #{tpu_custom_call.1} parent=1 // pred_check
      _
    $region27: #{tpu_custom_call.1} parent=1 // pred_check_branch
      %213 = sbr.rel (0) target = $region29
    $region28: #{tpu_custom_call.1} parent=1 // pred_region
      %214 = dma.done [#allocation3], 128
    $region29: #{tpu_custom_call.1} parent=1 // pred_fallthru
      _
    %215 = vsyncpa [#allocation3], 1

</llo_original>
